<compile_context>
chip_gen: v5e
topology: v5e:2x2
jax: 0.10.0
libtpu: 0.0.40
codegen_flags: <defaults>
</compile_context>

<pallas_src>
import functools

import jax
import jax.numpy as jnp
from jax.experimental import pallas as pl
from jax.experimental.pallas import tpu as pltpu


def node_update_kernel(h_ref, agg_ref, w_ref, b_ref, o_ref):
    # Fused: add aggregated history in f32 (VPU), cast to bf16 for the block-diag linear
    # (MXU, f32 accumulation), add bias, ReLU.  No reshapes in-kernel.
    hs = h_ref[...].astype(jnp.float32) + agg_ref[...].astype(jnp.float32)
    y = jnp.dot(hs.astype(w_ref.dtype), w_ref[...],
                preferred_element_type=jnp.float32)              # [tile_r, fold*out]
    y = y + b_ref[...]                                           # broadcast bias row
    o_ref[...] = jnp.maximum(y, 0.0).astype(o_ref.dtype)         # ReLU


def pick_fold(out_feats):
    """Fold factor so the output block is 128 lanes wide (falls back to 1)."""
    if out_feats < 128 and 128 % out_feats == 0:
        return 128 // out_feats
    return 1


def prepare_linear_params(weight, bias, fold, param_dtype=jnp.bfloat16):
    """Hoisted, once per layer: torch-layout weight [out,in] -> block-diag [fold*in, fold*out]."""
    w_t = weight.T.astype(param_dtype)                           # [in, out]
    w_block = jnp.kron(jnp.eye(fold, dtype=param_dtype), w_t)    # exact block-diag copies
    b_row = jnp.tile(bias.astype(jnp.float32), fold).reshape(1, -1)  # [1, fold*out]
    return w_block, b_row


def _vmem_capacity_bytes():
    try:
        return int(pltpu.get_tpu_info().vmem_capacity_bytes)
    except Exception:
        return 64 * 1024 * 1024   # conservative: v7x per-TensorCore VMEM


@functools.partial(jax.jit, static_argnames=("fold", "tile_nodes", "out_dtype"))
def node_update(h, agg_h, w_block, b_row, *, fold, tile_nodes=8192,
                out_dtype=jnp.float32):
    """h, agg_h: [N, in_feats]; w_block: [fold*in, fold*out]; b_row: [1, fold*out]."""
    N, in_feats = h.shape
    F_in, F_out = w_block.shape
    out_feats = F_out // fold
    assert F_in == in_feats * fold

    # Zero-pad N up to a multiple of fold (keeps the 128-lane unmasked-store path);
    # the padded rows are sliced off at the end.  Cheap fused op under jit.
    pad = (-N) % fold
    if pad:
        h = jnp.pad(h, ((0, pad), (0, 0)))
        agg_h = jnp.pad(agg_h, ((0, pad), (0, 0)))
    Np = N + pad
    R = Np // fold

    # Row-major [Np, in] -> [R, fold*in] is a free view under jit.
    h2 = h.reshape(R, F_in)
    a2 = agg_h.reshape(R, F_in)

    # Big row tiles to amortize the ~0.35us/step pipeline overhead; 16-row aligned.
    MIN_T = 16
    tile_r = max(MIN_T, min(tile_nodes // fold, R))
    if tile_r >= R:
        if R >= 2048:
            # split so the "parallel" grid axis can shard across v7x's two TensorCores
            tile_r = ((pl.cdiv(R, 2) + MIN_T - 1) // MIN_T) * MIN_T
        else:
            tile_r = R
    else:
        tile_r = max(MIN_T, (tile_r // MIN_T) * MIN_T)

    # Keep the double-buffered working set inside the device VMEM budget.
    out_isz = jnp.dtype(out_dtype).itemsize
    in_bytes = h2.dtype.itemsize + a2.dtype.itemsize

    def _vmem_est(tr):
        return (2 * tr * F_in * in_bytes              # h + agg, double-buffered
                + 2 * tr * F_out * out_isz            # output, double-buffered
                + 2 * F_in * F_out * w_block.dtype.itemsize   # resident weight
                + 2 * F_out * b_row.dtype.itemsize)           # resident bias

    vmem_budget = _vmem_capacity_bytes() - (8 << 20)
    while tile_r > MIN_T and _vmem_est(tile_r) > vmem_budget:
        tile_r = max(MIN_T, ((tile_r // 2 + MIN_T - 1) // MIN_T) * MIN_T)
    vmem_est = _vmem_est(tile_r)
    grid_r = pl.cdiv(R, tile_r)           # tail block masked by Pallas

    cp_kwargs = dict(dimension_semantics=("parallel",))
    if vmem_est > 10 * 1024 * 1024:
        # Raise the scoped-VMEM limit (v5e default is only 16 MiB) but never past physical.
        cp_kwargs["vmem_limit_bytes"] = int(
            min(max(2 * vmem_est, vmem_est + (4 << 20)), vmem_budget))

    cost = pl.CostEstimate(
        flops=2 * Np * in_feats * out_feats,          # true FLOPs, not fold-inflated
        transcendentals=0,
        bytes_accessed=(h2.size * h2.dtype.itemsize + a2.size * a2.dtype.itemsize
                        + F_in * F_out * w_block.dtype.itemsize
                        + F_out * b_row.dtype.itemsize
                        + R * F_out * out_isz),
    )

    out2 = pl.pallas_call(
        node_update_kernel,
        out_shape=jax.ShapeDtypeStruct((R, F_out), out_dtype),
        grid_spec=pltpu.PrefetchScalarGridSpec(
            num_scalar_prefetch=0,
            grid=(grid_r,),
            in_specs=[
                pl.BlockSpec((tile_r, F_in), lambda i: (i, 0)),   # h tile (lane-dense)
                pl.BlockSpec((tile_r, F_in), lambda i: (i, 0)),   # agg_h tile
                pl.BlockSpec((F_in, F_out), lambda i: (0, 0)),    # block-diag weight (resident)
                pl.BlockSpec((1, F_out), lambda i: (0, 0)),       # bias row (resident)
            ],
            out_specs=pl.BlockSpec((tile_r, F_out), lambda i: (i, 0)),  # 128-lane-wide store
        ),
        compiler_params=pltpu.CompilerParams(**cp_kwargs),
        cost_estimate=cost,
    )(h2, a2, w_block, b_row)

    # Free view back to [Np, out_feats]; slice off padded rows.
    return out2.reshape(Np, out_feats)[:N]


if __name__ == "__main__":
    in_feats, out_feats = 64, 32

    key = jax.random.PRNGKey(0)
    k_h, k_agg, k_w, k_b = jax.random.split(key, 4)

    # Deterministic Linear params (torch layout: weight [out, in], bias [out]).
    bound = 1.0 / (in_feats ** 0.5)
    weight = jax.random.uniform(k_w, (out_feats, in_feats), jnp.float32, -bound, bound)
    bias = jax.random.uniform(k_b, (out_feats,), jnp.float32, -bound, bound)

    fold = pick_fold(out_feats)                                  # 4 -> 128-lane output
    w_block, b_row = prepare_linear_params(weight, bias, fold)   # hoisted, once per layer

    def reference(h, agg):
        # Same rounding the kernel applies: f32 add, bf16 matmul operands, f32 accumulate.
        hs = (h + agg).astype(jnp.bfloat16).astype(jnp.float32)
        w = weight.astype(jnp.bfloat16).astype(jnp.float32)
        y = jnp.matmul(hs, w.T, precision=jax.lax.Precision.HIGHEST) + bias
        return jnp.maximum(y, 0.0)

    # N=128 (divisible by fold) and N=130 (exercises zero-pad + masked tail path).
    for N in (128, 130):
        kh, ka = jax.random.split(jax.random.fold_in(k_h, N))
        h = jax.random.normal(kh, (N, in_feats), dtype=jnp.float32)
        agg_h = jax.random.normal(ka, (N, in_feats), dtype=jnp.float32)

        out = node_update(h, agg_h, w_block, b_row, fold=fold)
        out = jax.block_until_ready(out)

        ref = reference(h, agg_h)
        assert out.shape == (N, out_feats)
        assert jnp.allclose(out, ref, atol=2e-3, rtol=2e-3), f"mismatch vs reference (N={N})"

    print("KERNEL_OK")
</pallas_src>

<mosaic_0001>
module attributes {stable_mosaic.version = 11 : i64} {
  func.func @node_update_kernel(%arg0: i32, %arg1: memref<32x256xf32, #tpu.memory_space<vmem>>, %arg2: memref<32x256xf32, #tpu.memory_space<vmem>>, %arg3: memref<256x128xbf16, #tpu.memory_space<vmem>>, %arg4: memref<1x128xf32, #tpu.memory_space<vmem>>, %arg5: memref<32x128xf32, #tpu.memory_space<vmem>>) attributes {dimension_semantics = [#tpu.dimension_semantics<parallel>], iteration_bounds = array<i64: 1>, scalar_prefetch = 0 : i64, scratch_operands = 0 : i64, tpu.core_type = #tpu.core_type<tc>, window_params = [{transform_indices = @transform_0, window_bounds = array<i64: 32, 256>}, {transform_indices = @transform_1, window_bounds = array<i64: 32, 256>}, {pipeline_mode = #tpu.pipeline_mode<synchronous>, transform_indices = @transform_2, window_bounds = array<i64: 256, 128>}, {pipeline_mode = #tpu.pipeline_mode<synchronous>, transform_indices = @transform_3, window_bounds = array<i64: 1, 128>}, {transform_indices = @transform_4, window_bounds = array<i64: 32, 128>}]} {
    %c0 = arith.constant 0 : index
    %c0_0 = arith.constant 0 : index
    %0 = vector.load %arg1[%c0, %c0_0] : memref<32x256xf32, #tpu.memory_space<vmem>>, vector<32x256xf32>
    %c0_1 = arith.constant 0 : index
    %c0_2 = arith.constant 0 : index
    %1 = vector.load %arg2[%c0_1, %c0_2] : memref<32x256xf32, #tpu.memory_space<vmem>>, vector<32x256xf32>
    %2 = arith.addf %0, %1 : vector<32x256xf32>
    %3 = arith.truncf %2 : vector<32x256xf32> to vector<32x256xbf16>
    %c0_3 = arith.constant 0 : index
    %c0_4 = arith.constant 0 : index
    %4 = vector.load %arg3[%c0_3, %c0_4] : memref<256x128xbf16, #tpu.memory_space<vmem>>, vector<256x128xbf16>
    %cst = arith.constant dense<0.000000e+00> : vector<32x128xf32>
    %5 = tpu.matmul %3, %4, %cst {dimension_numbers = #tpu.dot_dimension_numbers<[1], [0], [0], [1], [0, 0, 1, 1], [], []>} : vector<32x256xbf16>, vector<256x128xbf16>, vector<32x128xf32> -> vector<32x128xf32>
    %c0_5 = arith.constant 0 : index
    %c0_6 = arith.constant 0 : index
    %6 = vector.load %arg4[%c0_5, %c0_6] : memref<1x128xf32, #tpu.memory_space<vmem>>, vector<1x128xf32>
    %7 = vector.broadcast %6 : vector<1x128xf32> to vector<32x128xf32>
    %8 = arith.addf %5, %7 : vector<32x128xf32>
    %cst_7 = arith.constant 0.000000e+00 : f32
    %9 = vector.broadcast %cst_7 : f32 to vector<32x128xf32>
    %10 = arith.maximumf %8, %9 : vector<32x128xf32>
    %c0_8 = arith.constant 0 : index
    %c0_9 = arith.constant 0 : index
    %11 = vector.load %arg5[%c0_8, %c0_9] : memref<32x128xf32, #tpu.memory_space<vmem>>, vector<32x128xf32>
    tpu.vector_store %arg5[%c0_8, %c0_9], %10 {strides = array<i32>} : memref<32x128xf32, #tpu.memory_space<vmem>>, vector<32x128xf32>,
    return
  }
  func.func @transform_0(%arg0: i32) -> (i32, i32) {
    %c0_i32 = arith.constant 0 : i32
    %c0_i32_0 = arith.constant 0 : i32
    return %arg0, %c0_i32 : i32, i32
  }
  func.func @transform_1(%arg0: i32) -> (i32, i32) {
    %c0_i32 = arith.constant 0 : i32
    %c0_i32_0 = arith.constant 0 : i32
    return %arg0, %c0_i32 : i32, i32
  }
  func.func @transform_2(%arg0: i32) -> (i32, i32) {
    %c0_i32 = arith.constant 0 : i32
    %c0_i32_0 = arith.constant 0 : i32
    %c0_i32_1 = arith.constant 0 : i32
    return %c0_i32, %c0_i32_0 : i32, i32
  }
  func.func @transform_3(%arg0: i32) -> (i32, i32) {
    %c0_i32 = arith.constant 0 : i32
    %c0_i32_0 = arith.constant 0 : i32
    %c0_i32_1 = arith.constant 0 : i32
    return %c0_i32, %c0_i32_0 : i32, i32
  }
  func.func @transform_4(%arg0: i32) -> (i32, i32) {
    %c0_i32 = arith.constant 0 : i32
    %c0_i32_0 = arith.constant 0 : i32
    return %arg0, %c0_i32 : i32, i32
  }
}

</mosaic_0001>

<llo_original>
// kernel: node_update.1
$region0: #{node_update.1}
  #allocation0 [shape = 'u32[]', space=smem, size = 0x4, offset = 0x4, fixed_abs, tag = 'smem constant byte address 0x4 - core index']
  #allocation1 [shape = 'u32[72,128]{1,0:T(1,128)}', space=vmem, size = 0x9000, scoped, tag = 'internal scratch']
  %s0 = inlined_call_operand.vmem [shape: f32[32,256], index: 0, kind: input, shape index: {}]
  %s1 = inlined_call_operand.vmem [shape: f32[32,256], index: 1, kind: input, shape index: {}]
  %s2 = inlined_call_operand.vmem [shape: bf16[256,128], index: 2, kind: input, shape index: {}]
  %s3 = inlined_call_operand.vmem [shape: f32[1,128], index: 3, kind: input, shape index: {}]
  %s4 = inlined_call_operand.vmem [shape: f32[32,128], index: 4, kind: output, shape index: {}]
  %s5 = sld [smem:[#allocation0]]
  $region26: #{node_update.1} parent=0
    _
  %s7 = ssub.s32 1, %s5
  %s8 = scalar_select 0, %s7, %s5
  // Predicated region
  $region2: #{node_update.1} parent=0 // pred_check
    _
  $region3: #{node_update.1} parent=0 // pred_check_branch
    %10 = sbr.rel (0) target = $region5
  $region4: #{node_update.1} parent=0 // pred_region
    _
  $region5: #{node_update.1} parent=0 // pred_fallthru
    _
  // Predicated region
  $region6: #{node_update.1} parent=0 // pred_check
    _
  $region7: #{node_update.1} parent=0 // pred_check_branch
    %12 = sbr.rel (0) target = $region9
  $region8: #{node_update.1} parent=0 // pred_region
    _
  $region9: #{node_update.1} parent=0 // pred_fallthru
    _
  // Predicated region
  $region10: #{node_update.1} parent=0 // pred_check
    _
  $region11: #{node_update.1} parent=0 // pred_check_branch
    %14 = sbr.rel (0) target = $region13
  $region12: #{node_update.1} parent=0 // pred_region
    _
  $region13: #{node_update.1} parent=0 // pred_fallthru
    _
  // Predicated region
  $region14: #{node_update.1} parent=0 // pred_check
    _
  $region15: #{node_update.1} parent=0 // pred_check_branch
    %16 = sbr.rel (0) target = $region17
  $region16: #{node_update.1} parent=0 // pred_region
    _
  $region17: #{node_update.1} parent=0 // pred_fallthru
    _
  %v17 = vld [vmem:[%s0] sm:$0xff]
  %v18 = vld [vmem:[%s0 + $0x8] sm:$0xff]
  %v19 = vld [vmem:[%s0 + $0x10] sm:$0xff]
  %v20 = vld [vmem:[%s0 + $0x18] sm:$0xff]
  %v21 = vld [vmem:[%s0 + $0x20] sm:$0xff]
  %v22 = vld [vmem:[%s0 + $0x28] sm:$0xff]
  %v23 = vld [vmem:[%s0 + $0x30] sm:$0xff]
  %v24 = vld [vmem:[%s0 + $0x38] sm:$0xff]
  %v25 = vld [vmem:[%s1] sm:$0xff]
  %v26 = vld [vmem:[%s1 + $0x8] sm:$0xff]
  %v27 = vld [vmem:[%s1 + $0x10] sm:$0xff]
  %v28 = vld [vmem:[%s1 + $0x18] sm:$0xff]
  %v29 = vld [vmem:[%s1 + $0x20] sm:$0xff]
  %v30 = vld [vmem:[%s1 + $0x28] sm:$0xff]
  %v31 = vld [vmem:[%s1 + $0x30] sm:$0xff]
  %v32 = vld [vmem:[%s1 + $0x38] sm:$0xff]
  %v33 = vadd.f32 %v17, %v25
  %v34 = vadd.f32 %v18, %v26
  %v35 = vadd.f32 %v19, %v27
  %v36 = vadd.f32 %v20, %v28
  %v37 = vadd.f32 %v21, %v29
  %v38 = vadd.f32 %v22, %v30
  %v39 = vadd.f32 %v23, %v31
  %v40 = vadd.f32 %v24, %v32
  %v41 = vpack.c.bf16 %v35, %v33
  %v42 = vpack.c.bf16 %v36, %v34
  %v43 = vpack.c.bf16 %v39, %v37
  %v44 = vpack.c.bf16 %v40, %v38
  %v45 = vld [vmem:[%s2] sm:$0xf]
  %v46 = vld [vmem:[%s2 + $0x4] sm:$0xf]
  %v47 = vld [vmem:[%s2 + $0x8] sm:$0xf]
  %v48 = vld [vmem:[%s2 + $0xc] sm:$0xf]
  %v49 = vld [vmem:[%s2 + $0x10] sm:$0xf]
  %v50 = vld [vmem:[%s2 + $0x14] sm:$0xf]
  %v51 = vld [vmem:[%s2 + $0x18] sm:$0xf]
  %v52 = vld [vmem:[%s2 + $0x1c] sm:$0xf]
  %v53 = vld [vmem:[%s2 + $0x20] sm:$0xf]
  %v54 = vld [vmem:[%s2 + $0x24] sm:$0xf]
  %v55 = vld [vmem:[%s2 + $0x28] sm:$0xf]
  %v56 = vld [vmem:[%s2 + $0x2c] sm:$0xf]
  %v57 = vld [vmem:[%s2 + $0x30] sm:$0xf]
  %v58 = vld [vmem:[%s2 + $0x34] sm:$0xf]
  %v59 = vld [vmem:[%s2 + $0x38] sm:$0xf]
  %v60 = vld [vmem:[%s2 + $0x3c] sm:$0xf]
  %v61 = vld [vmem:[%s2 + $0x40] sm:$0xf]
  %v62 = vld [vmem:[%s2 + $0x44] sm:$0xf]
  %v63 = vld [vmem:[%s2 + $0x48] sm:$0xf]
  %v64 = vld [vmem:[%s2 + $0x4c] sm:$0xf]
  %v65 = vld [vmem:[%s2 + $0x50] sm:$0xf]
  %v66 = vld [vmem:[%s2 + $0x54] sm:$0xf]
  %v67 = vld [vmem:[%s2 + $0x58] sm:$0xf]
  %v68 = vld [vmem:[%s2 + $0x5c] sm:$0xf]
  %v69 = vld [vmem:[%s2 + $0x60] sm:$0xf]
  %v70 = vld [vmem:[%s2 + $0x64] sm:$0xf]
  %v71 = vld [vmem:[%s2 + $0x68] sm:$0xf]
  %v72 = vld [vmem:[%s2 + $0x6c] sm:$0xf]
  %v73 = vld [vmem:[%s2 + $0x70] sm:$0xf]
  %v74 = vld [vmem:[%s2 + $0x74] sm:$0xf]
  %v75 = vld [vmem:[%s2 + $0x78] sm:$0xf]
  %v76 = vld [vmem:[%s2 + $0x7c] sm:$0xf]
  %v77 = vld [vmem:[%s3] sm:$0x1]
  %v79 = vperm.slane %v77, 0
  %v113 = vunpack.c.l.b16 %v45
  %v114 = vunpack.c.l.b16 %v46
  %v115 = vunpack.c.l.b16 %v47
  %v116 = vunpack.c.l.b16 %v48
  %v117 = vunpack.c.l.b16 %v49
  %v118 = vunpack.c.l.b16 %v50
  %v119 = vunpack.c.l.b16 %v51
  %v120 = vunpack.c.l.b16 %v52
  %v121 = vunpack.c.l.b16 %v53
  %v122 = vunpack.c.l.b16 %v54
  %v123 = vunpack.c.l.b16 %v55
  %v124 = vunpack.c.l.b16 %v56
  %v125 = vunpack.c.l.b16 %v57
  %v126 = vunpack.c.l.b16 %v58
  %v127 = vunpack.c.l.b16 %v59
  %v128 = vunpack.c.l.b16 %v60
  %v129 = vunpack.c.l.b16 %v61
  %v130 = vunpack.c.l.b16 %v62
  %v131 = vunpack.c.l.b16 %v63
  %v132 = vunpack.c.l.b16 %v64
  %v133 = vunpack.c.l.b16 %v65
  %v134 = vunpack.c.l.b16 %v66
  %v135 = vunpack.c.l.b16 %v67
  %v136 = vunpack.c.l.b16 %v68
  %v137 = vunpack.c.l.b16 %v69
  %v138 = vunpack.c.l.b16 %v70
  %v139 = vunpack.c.l.b16 %v71
  %v140 = vunpack.c.l.b16 %v72
  %v141 = vunpack.c.l.b16 %v73
  %v142 = vunpack.c.l.b16 %v74
  %v143 = vunpack.c.l.b16 %v75
  %v144 = vunpack.c.l.b16 %v76
  %v145 = vpack.c.b16 %v114, %v113
  %v146 = vpack.c.b16 %v116, %v115
  %v147 = vpack.c.b16 %v118, %v117
  %v148 = vpack.c.b16 %v120, %v119
  %v149 = vpack.c.b16 %v122, %v121
  %v150 = vpack.c.b16 %v124, %v123
  %v151 = vpack.c.b16 %v126, %v125
  %v152 = vpack.c.b16 %v128, %v127
  %v153 = vpack.c.b16 %v130, %v129
  %v154 = vpack.c.b16 %v132, %v131
  %v155 = vpack.c.b16 %v134, %v133
  %v156 = vpack.c.b16 %v136, %v135
  %v157 = vpack.c.b16 %v138, %v137
  %v158 = vpack.c.b16 %v140, %v139
  %v159 = vpack.c.b16 %v142, %v141
  %v160 = vpack.c.b16 %v144, %v143
  %177 = vmatpush.bf16.msra.mxu0 %v152
  %178 = vmatpush.bf16.msra.mxu0 %v151
  %179 = vmatpush.bf16.msra.mxu0 %v150
  %180 = vmatpush.bf16.msra.mxu0 %v149
  %181 = vmatpush.bf16.msra.mxu0 %v148
  %182 = vmatpush.bf16.msra.mxu0 %v147
  %183 = vmatpush.bf16.msra.mxu0 %v146
  %184 = vmatpush.bf16.msra.mxu0 %v145
  %185 = vmatmul.bf16.gmra.mxu0 %v41
  %v186 = vpop.f32.mrf.mxu0
  %v187 = vadd.f32 %v79, %v186
  %v188 = vpop.f32.mrf.mxu0
  %v189 = vadd.f32 %v79, %v188
  %190 = vmatmul.bf16.gmra.mxu0 %v43
  %v191 = vpop.f32.mrf.mxu0
  %v192 = vadd.f32 %v79, %v191
  %v193 = vpop.f32.mrf.mxu0
  %v194 = vadd.f32 %v79, %v193
  %195 = vdwg.mxu0
  %196 = vmatpush.bf16.msra.mxu0 %v160
  %197 = vmatpush.bf16.msra.mxu0 %v159
  %198 = vmatpush.bf16.msra.mxu0 %v158
  %199 = vmatpush.bf16.msra.mxu0 %v157
  %200 = vmatpush.bf16.msra.mxu0 %v156
  %201 = vmatpush.bf16.msra.mxu0 %v155
  %202 = vmatpush.bf16.msra.mxu0 %v154
  %203 = vmatpush.bf16.msra.mxu0 %v153
  %204 = vmatmul.bf16.gmra.mxu0 %v42
  %v205 = vpop.f32.mrf.mxu0
  %v206 = vadd.f32 %v187, %v205
  %v207 = vpop.f32.mrf.mxu0
  %v208 = vadd.f32 %v189, %v207
  %209 = vmatmul.bf16.gmra.mxu0 %v44
  %v210 = vpop.f32.mrf.mxu0
  %v211 = vadd.f32 %v192, %v210
  %v212 = vpop.f32.mrf.mxu0
  %v213 = vadd.f32 %v194, %v212
  %214 = vdwg.mxu0
  %v215 = vmax.f32 %v206, 0.0
  %v216 = vmax.f32 %v208, 0.0
  %v217 = vmax.f32 %v211, 0.0
  %v218 = vmax.f32 %v213, 0.0
  %219 = vst [vmem:[%s4] sm:$0xff] %v215
  %220 = vst [vmem:[%s4 + $0x8] sm:$0xff] %v216
  %221 = vst [vmem:[%s4 + $0x10] sm:$0xff] %v217
  %222 = vst [vmem:[%s4 + $0x18] sm:$0xff] %v218
  // Predicated region
  $region18: #{node_update.1} parent=0 // pred_check
    _
  $region19: #{node_update.1} parent=0 // pred_check_branch
    %224 = sbr.rel (0) target = $region21
  $region20: #{node_update.1} parent=0 // pred_region
    _
  $region21: #{node_update.1} parent=0 // pred_fallthru
    _
  // Predicated region
  $region22: #{node_update.1} parent=0 // pred_check
    _
  $region23: #{node_update.1} parent=0 // pred_check_branch
    %226 = sbr.rel (0) target = $region25
  $region24: #{node_update.1} parent=0 // pred_region
    _
  $region25: #{node_update.1} parent=0 // pred_fallthru
    _

</llo_original>
